<compile_context>
chip_gen: v7x
topology: tpu7x:2x2x1
jax: 0.10.0
libtpu: 0.0.40
codegen_flags: <defaults>
</compile_context>

<pallas_src>
import jax
import jax.numpy as jnp
from jax.experimental import pallas as pl
from jax.experimental.pallas import tpu as pltpu


def _make_concat_kernel(S, bounds):
    """Kernel that copies x (rows [0, S)) and the embedding row (row S) into out.

    bounds: static, strictly increasing tuple of row offsets, bounds[0] == 0,
            bounds[-1] == S.  Each [bounds[c], bounds[c+1]) slab is one DMA.
    """
    n = len(bounds) - 1

    def kernel(x_hbm, emb_hbm, o_hbm, sem):
        # Chunked HBM -> HBM copies of x into out[0:S].
        copies = []
        for c in range(n):
            lo = bounds[c]
            sz = bounds[c + 1] - bounds[c]
            copies.append(
                pltpu.make_async_copy(
                    x_hbm.at[pl.ds(lo, sz)],
                    o_hbm.at[pl.ds(lo, sz)],
                    sem.at[c],
                )
            )
        # Tiny HBM -> HBM copy of the (pre-gathered) embedding row into out[S].
        emb_cp = pltpu.make_async_copy(emb_hbm, o_hbm.at[pl.ds(S, 1)], sem.at[n])

        for cp in copies:
            cp.start()
        emb_cp.start()
        for cp in copies:
            cp.wait()
        emb_cp.wait()

    return kernel


def time_step_embedding(x, t, emb_table, *, chunks=None,
                        max_chunks=4, min_chunk_bytes=4 * 1024 * 1024):
    """x: [S, B, D]; t: [B] int; emb_table: [num_embeddings, D] -> [S+1, B, D]."""
    S, B, D = x.shape
    V, D2 = emb_table.shape
    assert D2 == D
    assert x.dtype == emb_table.dtype, "torch.cat requires matching dtypes"

    # Embedding lookup in plain XLA (negligible: B rows), as per perf review.
    emb = jnp.take(emb_table, t.astype(jnp.int32), axis=0).reshape(1, B * D)

    # Free row-major collapse of the trailing (B, D) axes; DMA is shape-agnostic.
    x2 = x.reshape(S, B * D)

    # Static chunking of the bulk copy: a handful of large DMAs for big inputs,
    # a single DMA for small ones (per-step / per-descriptor overhead dominates
    # tiny shapes, so fewer descriptors is strictly better there).
    if chunks is None:
        total_bytes = S * B * D * x2.dtype.itemsize
        chunks = max(1, min(max_chunks, total_bytes // min_chunk_bytes, S))
    n_chunks = int(max(1, min(chunks, S)))
    bounds = tuple(round(c * S / n_chunks) for c in range(n_chunks + 1))

    kernel = _make_concat_kernel(S, bounds)

    out2 = pl.pallas_call(
        kernel,
        out_shape=jax.ShapeDtypeStruct((S + 1, B * D), x.dtype),
        in_specs=[
            pl.BlockSpec(memory_space=pl.ANY),   # x stays in HBM
            pl.BlockSpec(memory_space=pl.ANY),   # gathered embedding row (HBM)
        ],
        out_specs=pl.BlockSpec(memory_space=pl.ANY),
        scratch_shapes=[pltpu.SemaphoreType.DMA((n_chunks + 1,))],
        compiler_params=pltpu.CompilerParams(has_side_effects=True),
    )(x2, emb)

    return out2.reshape(S + 1, B, D)


if __name__ == "__main__":
    # Small shapes consistent with the module: seq=8, batch=2, d_model=32.
    S, B, D = 8, 2, 32
    NUM_EMB = 1000

    key = jax.random.PRNGKey(0)
    kx, kt, ke = jax.random.split(key, 3)

    x = jax.random.normal(kx, (S, B, D), dtype=jnp.float32)
    table = 0.02 * jax.random.normal(ke, (NUM_EMB, D), dtype=jnp.float32)
    t = jax.random.randint(kt, (B,), 0, NUM_EMB, dtype=jnp.int32)

    out = jax.block_until_ready(time_step_embedding(x, t, table))
    ref = jnp.concatenate([x, table[t][None, :, :]], axis=0)
    assert out.shape == (S + 1, B, D)
    assert jnp.allclose(out, ref, atol=1e-6), "mismatch vs reference"

    # Extra check: odd seq length + forced multi-chunk copy path.
    S2 = 13
    x_b = jax.random.normal(kx, (S2, B, D), dtype=jnp.float32)
    out_b = jax.block_until_ready(time_step_embedding(x_b, t, table, chunks=3))
    ref_b = jnp.concatenate([x_b, table[t][None, :, :]], axis=0)
    assert jnp.allclose(out_b, ref_b, atol=1e-6), "mismatch vs reference (S=13)"

    print("KERNEL_OK")
</pallas_src>

<mosaic_0001>
module attributes {stable_mosaic.version = 11 : i64} {
  func.func @kernel(%arg0: memref<8x64xf32, #tpu.memory_space<any>>, %arg1: memref<1x64xf32, #tpu.memory_space<any>>, %arg2: memref<9x64xf32, #tpu.memory_space<any>>, %arg3: memref<2x!tpu.dma_semaphore, #tpu.memory_space<semaphore_mem>>) attributes {dimension_semantics = [], scalar_prefetch = 0 : i64, scratch_operands = 1 : i64, tpu.core_type = #tpu.core_type<tc>} {
    %c0_i32 = arith.constant 0 : i32
    %c0_i32_0 = arith.constant 0 : i32
    %c0_i32_1 = arith.constant 0 : i32
    %0 = tpu.memref_slice %arg0[%c0_i32_0, %c0_i32_1] : memref<8x64xf32, #tpu.memory_space<any>> -> memref<8x64xf32, #tpu.memory_space<any>>
    %c0_i32_2 = arith.constant 0 : i32
    %c0_i32_3 = arith.constant 0 : i32
    %1 = tpu.memref_slice %arg2[%c0_i32_2, %c0_i32_3] : memref<9x64xf32, #tpu.memory_space<any>> -> memref<8x64xf32, #tpu.memory_space<any>>
    %2 = tpu.memref_slice %arg3[%c0_i32] : memref<2x!tpu.dma_semaphore, #tpu.memory_space<semaphore_mem>> -> memref<1x!tpu.dma_semaphore, #tpu.memory_space<semaphore_mem>>
    %3 = tpu.memref_squeeze %2 : memref<1x!tpu.dma_semaphore, #tpu.memory_space<semaphore_mem>> -> memref<!tpu.dma_semaphore, #tpu.memory_space<semaphore_mem>>
    tpu.enqueue_dma source(%0 : memref<8x64xf32, #tpu.memory_space<any>>) target(%1 : memref<8x64xf32, #tpu.memory_space<any>>) target_semaphore(%3 : memref<!tpu.dma_semaphore, #tpu.memory_space<semaphore_mem>>)
    %c1_i32 = arith.constant 1 : i32
    %c8_i32 = arith.constant 8 : i32
    %c0_i32_4 = arith.constant 0 : i32
    %4 = tpu.memref_slice %arg2[%c8_i32, %c0_i32_4] : memref<9x64xf32, #tpu.memory_space<any>> -> memref<1x64xf32, #tpu.memory_space<any>>
    %5 = tpu.memref_slice %arg3[%c1_i32] : memref<2x!tpu.dma_semaphore, #tpu.memory_space<semaphore_mem>> -> memref<1x!tpu.dma_semaphore, #tpu.memory_space<semaphore_mem>>
    %6 = tpu.memref_squeeze %5 : memref<1x!tpu.dma_semaphore, #tpu.memory_space<semaphore_mem>> -> memref<!tpu.dma_semaphore, #tpu.memory_space<semaphore_mem>>
    tpu.enqueue_dma source(%arg1 : memref<1x64xf32, #tpu.memory_space<any>>) target(%4 : memref<1x64xf32, #tpu.memory_space<any>>) target_semaphore(%6 : memref<!tpu.dma_semaphore, #tpu.memory_space<semaphore_mem>>)
    %c0_i32_5 = arith.constant 0 : i32
    %c0_i32_6 = arith.constant 0 : i32
    %c0_i32_7 = arith.constant 0 : i32
    %7 = tpu.memref_slice %arg0[%c0_i32_6, %c0_i32_7] : memref<8x64xf32, #tpu.memory_space<any>> -> memref<8x64xf32, #tpu.memory_space<any>>
    %c0_i32_8 = arith.constant 0 : i32
    %c0_i32_9 = arith.constant 0 : i32
    %8 = tpu.memref_slice %arg2[%c0_i32_8, %c0_i32_9] : memref<9x64xf32, #tpu.memory_space<any>> -> memref<8x64xf32, #tpu.memory_space<any>>
    %9 = tpu.memref_slice %arg3[%c0_i32_5] : memref<2x!tpu.dma_semaphore, #tpu.memory_space<semaphore_mem>> -> memref<1x!tpu.dma_semaphore, #tpu.memory_space<semaphore_mem>>
    %10 = tpu.memref_squeeze %9 : memref<1x!tpu.dma_semaphore, #tpu.memory_space<semaphore_mem>> -> memref<!tpu.dma_semaphore, #tpu.memory_space<semaphore_mem>>
    tpu.wait_dma2 semaphore(%10 : memref<!tpu.dma_semaphore, #tpu.memory_space<semaphore_mem>>) src(%7 : memref<8x64xf32, #tpu.memory_space<any>>) dst(%8 : memref<8x64xf32, #tpu.memory_space<any>>)
    %c1_i32_10 = arith.constant 1 : i32
    %c8_i32_11 = arith.constant 8 : i32
    %c0_i32_12 = arith.constant 0 : i32
    %11 = tpu.memref_slice %arg2[%c8_i32_11, %c0_i32_12] : memref<9x64xf32, #tpu.memory_space<any>> -> memref<1x64xf32, #tpu.memory_space<any>>
    %12 = tpu.memref_slice %arg3[%c1_i32_10] : memref<2x!tpu.dma_semaphore, #tpu.memory_space<semaphore_mem>> -> memref<1x!tpu.dma_semaphore, #tpu.memory_space<semaphore_mem>>
    %13 = tpu.memref_squeeze %12 : memref<1x!tpu.dma_semaphore, #tpu.memory_space<semaphore_mem>> -> memref<!tpu.dma_semaphore, #tpu.memory_space<semaphore_mem>>
    tpu.wait_dma2 semaphore(%13 : memref<!tpu.dma_semaphore, #tpu.memory_space<semaphore_mem>>) src(%arg1 : memref<1x64xf32, #tpu.memory_space<any>>) dst(%11 : memref<1x64xf32, #tpu.memory_space<any>>)
    return
  }
}

</mosaic_0001>

<llo_original>
// kernel: tpu_custom_call.1
$region0: #{tpu_custom_call.1}
  #allocation0 [shape = 'u32[]', space=smem, size = 0x4, offset = 0x4, fixed_abs, tag = 'smem constant byte address 0x4 - core index']
  #allocation1 [shape = 'u32[144,128]{1,0:T(1,128)}', space=vmem, size = 0x12000, scoped, tag = 'internal scratch']
  #allocation2 [shape = 's32[2]{0}', space=sflag, size = 0x8, scoped, tag = 'scratch operand']
  #allocation3 [shape = 's32[]', space=sflag, size = 0x4, offset = 0, fixed_abs, tag = 'sflag constant byte address 0x0 - dummy sync flag']
  #allocation4 [shape = 'u32[0]{0}', space=smem, size = 0, offset = 0, fixed_abs, tag = 'smem constant byte address 0x0 - null']
  #allocation5 [shape = 's32[]', space=sflag, size = 0x4, offset = 0, fixed_abs, tag = 'sflag constant byte address 0x0 - dummy sync flag']
  #allocation6 [shape = 's32[]', space=sflag, size = 0x4, offset = 0, fixed_abs, tag = 'sflag constant byte address 0x0 - dummy sync flag']
  #allocation7 [shape = 'u32[]', space=smem, size = 0x4, offset = 0x44, fixed_abs, tag = 'smem constant byte address 0x44 - assertion arg 0']
  #allocation8 [shape = 'u32[]', space=smem, size = 0x4, offset = 0x48, fixed_abs, tag = 'smem constant byte address 0x48 - assertion arg 1']
  %s0 = inlined_call_operand.hbm [shape: f32[8,64], index: 0, kind: input, shape index: {}]
  %s1 = inlined_call_operand.vmem [shape: f32[1,64], index: 1, kind: input, shape index: {}]
  %s2 = inlined_call_operand.hbm [shape: f32[9,64], index: 2, kind: output, shape index: {}]
  %s3 = sld [smem:[#allocation0]]
  $region6: #{tpu_custom_call.1} parent=0
    _
  %s5 = ssub.s32 1, %s3
  %s6 = scalar_select 0, %s5, %s3
  %s8 = sshll.u32 1, 14
  %s9 = sxor.u32 4294967295, %s8
  %s12 = sshll.u32 3, 24
  %s13 = sxor.u32 4294967295, %s12
  %s14 = sand.u32 0, %s13
  %s16 = sor.u32 %s14, 0
  %19 = dma.general %s0, 128, %s2, [#allocation2], [#allocation3], [#allocation4], %s16, 0
  %s20 = scalar_lea.hbm %s2, 128
  %s21 = scalar_lea.sflag [#allocation2], 1
  // Predicated region
  $region2: #{tpu_custom_call.1} parent=0 // pred_check
    _
  $region3: #{tpu_custom_call.1} parent=0 // pred_check_branch
    %23 = sbr.rel target = $region5
  $region4: #{tpu_custom_call.1} parent=0 // pred_region
    %24 = sst [smem:[#allocation7]] [#allocation6]
    %25 = sst [smem:[#allocation8]] [#allocation5]
  $region5: #{tpu_custom_call.1} parent=0 // pred_fallthru
    _
  %27 = shalt.err (0)
  %s29 = sshll.u32 %s1, 4
  %s30 = int_to_ptr.vmem [resolvable:$true] %s29
  %32 = dma.vmem_to_hbm [thread:$0]  %s30, 16, %s20, %s21
  %s33 = smul.u32 8, 1
  %s34 = sshll.u32 %s33, 4
  %35 = dma.done [#allocation2], %s34
  %s36 = smul.u32 1, 1
  %s37 = sshll.u32 %s36, 4
  %38 = dma.done %s21, %s37
  %39 = vsyncmov [#allocation2]
  %s40 = vpop.sfrf %39
  %p41 = scmp.eq.s32.totalorder %s40, 0
  %p42 = pneg %p41
  %44 = shalt.err (%p42)
  %s45 = scalar_lea.sflag [#allocation2], 1
  %46 = vsyncmov %s45
  %s47 = vpop.sfrf %46
  %p48 = scmp.eq.s32.totalorder %s47, 0
  %p49 = pneg %p48
  %51 = shalt.err (%p49)

</llo_original>
